<compile_context>
chip_gen: v7x
topology: tpu7x:2x2x1
jax: 0.10.0
libtpu: 0.0.40
codegen_flags: <defaults>
</compile_context>

<pallas_src>
import functools

import jax
import jax.numpy as jnp
from jax.experimental import pallas as pl
from jax.experimental.pallas import tpu as pltpu


# ------------------------------------------------------------------ fused toRGB_1 kernel
def _torgb_kernel(x_ref, w_ref, b_ref, o_ref, *, eps):
    # x_ref: (1, Cin, HW)   one batch element, spatial flattened onto lanes
    # w_ref: (Cout, Cin)    1x1 conv weight
    # b_ref: (Cout, 1)      conv bias
    # o_ref: (1, Cout, HW)
    x = x_ref[0].astype(jnp.float32)          # (Cin, HW)
    w = w_ref[...].astype(jnp.float32)        # (Cout, Cin)
    b = b_ref[...].astype(jnp.float32)        # (Cout, 1)

    # 1x1 conv == per-pixel channel mix.  Cin/Cout are tiny (4 -> 3), so do it as an
    # exact-f32 VPU broadcast multiply + sublane reduce; lanes stay fully dense (HW).
    y = jnp.sum(w[:, :, None] * x[None, :, :], axis=1) + b      # (Cout, HW)

    # InstanceNorm2d: per-(sample, channel) stats over the spatial axis,
    # biased variance, eps=1e-5, no affine (PyTorch defaults).
    mean = jnp.mean(y, axis=1, keepdims=True)                   # (Cout, 1)
    var = jnp.mean(jnp.square(y - mean), axis=1, keepdims=True) # (Cout, 1)
    yn = (y - mean) * jax.lax.rsqrt(var + eps)

    o_ref[...] = jnp.tanh(yn)[None].astype(o_ref.dtype)


def torgb_forward(x_nchw, weight_oihw, bias, eps=1e-5):
    """toRGB_1 forward: 1x1 conv + InstanceNorm2d + tanh, fused in one Pallas kernel."""
    N, Cin, H, W = x_nchw.shape
    Cout = weight_oihw.shape[0]
    HW = H * W

    x3 = x_nchw.reshape(N, Cin, HW)          # free reshape, keeps NCHW memory order
    w2 = weight_oihw.reshape(Cout, Cin)      # (Cout, Cin, 1, 1) -> (Cout, Cin)
    b2 = bias.reshape(Cout, 1)

    kernel = functools.partial(_torgb_kernel, eps=eps)
    out = pl.pallas_call(
        kernel,
        out_shape=jax.ShapeDtypeStruct((N, Cout, HW), x_nchw.dtype),
        grid=(N,),
        in_specs=[
            pl.BlockSpec((1, Cin, HW), lambda n: (n, 0, 0)),
            pl.BlockSpec((Cout, Cin), lambda n: (0, 0)),   # constant index -> fetched once
            pl.BlockSpec((Cout, 1), lambda n: (0, 0)),     # constant index -> fetched once
        ],
        out_specs=pl.BlockSpec((1, Cout, HW), lambda n: (n, 0, 0)),
        compiler_params=pltpu.CompilerParams(
            dimension_semantics=("parallel",)),            # batch across TCs on v7x
    )(x3, w2, b2)
    return out.reshape(N, Cout, H, W)


# --------------------------------------------------------------------------- JAX reference
def ref_forward(x_nchw, weight_oihw, bias, eps=1e-5):
    y = jax.lax.conv_general_dilated(
        x_nchw, weight_oihw, (1, 1), "VALID",
        dimension_numbers=("NCHW", "OIHW", "NCHW"),
        precision=jax.lax.Precision.HIGHEST,
    ) + bias[None, :, None, None]
    mean = jnp.mean(y, axis=(2, 3), keepdims=True)
    var = jnp.mean(jnp.square(y - mean), axis=(2, 3), keepdims=True)
    return jnp.tanh((y - mean) * jax.lax.rsqrt(var + eps))


# ------------------------------------------------------------------------------------ main
if __name__ == "__main__":
    key = jax.random.PRNGKey(0)
    N, in_c, H, W = 2, 4, 16, 16
    out_c = 3  # toRGB outputs RGB

    keys = jax.random.split(key, 3)
    fan_in = in_c * 1 * 1
    fan_out = out_c * 1 * 1
    xavier_std = (2.0 / (fan_in + fan_out)) ** 0.5
    bias_bound = 1.0 / (fan_in ** 0.5)

    # PyTorch layouts / inits: xavier_normal_ conv weight (Cout, Cin, 1, 1),
    # Conv2d default bias init U(-1/sqrt(fan_in), 1/sqrt(fan_in)).
    weight = xavier_std * jax.random.normal(keys[0], (out_c, in_c, 1, 1), jnp.float32)
    bias = jax.random.uniform(keys[1], (out_c,), jnp.float32, -bias_bound, bias_bound)
    x = jax.random.normal(keys[2], (N, in_c, H, W), jnp.float32)

    out = torgb_forward(x, weight, bias)
    out = jax.block_until_ready(out)

    assert out.shape == (N, out_c, H, W), out.shape

    ref = ref_forward(x, weight, bias)
    err = float(jnp.max(jnp.abs(out - ref)))
    assert jnp.allclose(out, ref, atol=1e-4, rtol=1e-4), err

    print("KERNEL_OK")
</pallas_src>

<mosaic_0001>
module attributes {stable_mosaic.version = 11 : i64} {
  func.func @_torgb_kernel(%arg0: i32, %arg1: memref<1x4x256xf32, #tpu.memory_space<vmem>>, %arg2: memref<3x4xf32, #tpu.memory_space<vmem>>, %arg3: memref<3x1xf32, #tpu.memory_space<vmem>>, %arg4: memref<1x3x256xf32, #tpu.memory_space<vmem>>) attributes {dimension_semantics = [#tpu.dimension_semantics<parallel>], iteration_bounds = array<i64: 2>, scalar_prefetch = 0 : i64, scratch_operands = 0 : i64, tpu.core_type = #tpu.core_type<tc>, window_params = [{transform_indices = @transform_0, window_bounds = array<i64: 1, 4, 256>}, {pipeline_mode = #tpu.pipeline_mode<synchronous>, transform_indices = @transform_1, window_bounds = array<i64: 3, 4>}, {pipeline_mode = #tpu.pipeline_mode<synchronous>, transform_indices = @transform_2, window_bounds = array<i64: 3, 1>}, {transform_indices = @transform_3, window_bounds = array<i64: 1, 3, 256>}]} {
    %c0 = arith.constant 0 : index
    %c0_0 = arith.constant 0 : index
    %c0_1 = arith.constant 0 : index
    %0 = vector.load %arg1[%c0, %c0_0, %c0_1] : memref<1x4x256xf32, #tpu.memory_space<vmem>>, vector<1x4x256xf32>
    %1 = vector.shape_cast %0 : vector<1x4x256xf32> to vector<4x256xf32>
    %c0_2 = arith.constant 0 : index
    %c0_3 = arith.constant 0 : index
    %2 = vector.load %arg2[%c0_2, %c0_3] : memref<3x4xf32, #tpu.memory_space<vmem>>, vector<3x4xf32>
    %c0_4 = arith.constant 0 : index
    %c0_5 = arith.constant 0 : index
    %3 = vector.load %arg3[%c0_4, %c0_5] : memref<3x1xf32, #tpu.memory_space<vmem>>, vector<3x1xf32>
    %4 = vector.shape_cast %2 : vector<3x4xf32> to vector<3x4x1xf32>
    %5 = vector.shape_cast %1 : vector<4x256xf32> to vector<1x4x256xf32>
    %6 = vector.broadcast %4 : vector<3x4x1xf32> to vector<3x4x256xf32>
    %7 = vector.broadcast %5 : vector<1x4x256xf32> to vector<3x4x256xf32>
    %8 = arith.mulf %6, %7 : vector<3x4x256xf32>
    %cst = arith.constant dense<0.000000e+00> : vector<3x256xf32>
    %9 = vector.multi_reduction <add>, %8, %cst [1] : vector<3x4x256xf32> to vector<3x256xf32>
    %10 = vector.broadcast %3 : vector<3x1xf32> to vector<3x256xf32>
    %11 = arith.addf %9, %10 : vector<3x256xf32>
    %cst_6 = arith.constant dense<0.000000e+00> : vector<3xf32>
    %12 = vector.multi_reduction <add>, %11, %cst_6 [1] : vector<3x256xf32> to vector<3xf32>
    %13 = vector.shape_cast %12 : vector<3xf32> to vector<3x1xf32>
    %cst_7 = arith.constant 2.560000e+02 : f32
    %14 = vector.broadcast %cst_7 : f32 to vector<3x1xf32>
    %15 = arith.divf %13, %14 : vector<3x1xf32>
    %16 = vector.broadcast %15 : vector<3x1xf32> to vector<3x256xf32>
    %17 = arith.subf %11, %16 : vector<3x256xf32>
    %18 = arith.mulf %17, %17 : vector<3x256xf32>
    %cst_8 = arith.constant dense<0.000000e+00> : vector<3xf32>
    %19 = vector.multi_reduction <add>, %18, %cst_8 [1] : vector<3x256xf32> to vector<3xf32>
    %20 = vector.shape_cast %19 : vector<3xf32> to vector<3x1xf32>
    %cst_9 = arith.constant 2.560000e+02 : f32
    %21 = vector.broadcast %cst_9 : f32 to vector<3x1xf32>
    %22 = arith.divf %20, %21 : vector<3x1xf32>
    %23 = vector.broadcast %15 : vector<3x1xf32> to vector<3x256xf32>
    %24 = arith.subf %11, %23 : vector<3x256xf32>
    %cst_10 = arith.constant 9.99999974E-6 : f32
    %25 = vector.broadcast %cst_10 : f32 to vector<3x1xf32>
    %26 = arith.addf %22, %25 : vector<3x1xf32>
    %27 = math.rsqrt %26 : vector<3x1xf32>
    %28 = vector.broadcast %27 : vector<3x1xf32> to vector<3x256xf32>
    %29 = arith.mulf %24, %28 : vector<3x256xf32>
    %30 = math.tanh %29 : vector<3x256xf32>
    %31 = vector.shape_cast %30 : vector<3x256xf32> to vector<1x3x256xf32>
    %c0_11 = arith.constant 0 : index
    %c0_12 = arith.constant 0 : index
    %c0_13 = arith.constant 0 : index
    %32 = vector.load %arg4[%c0_11, %c0_12, %c0_13] : memref<1x3x256xf32, #tpu.memory_space<vmem>>, vector<1x3x256xf32>
    tpu.vector_store %arg4[%c0_11, %c0_12, %c0_13], %31 {strides = array<i32>} : memref<1x3x256xf32, #tpu.memory_space<vmem>>, vector<1x3x256xf32>,
    return
  }
  func.func @transform_0(%arg0: i32) -> (i32, i32, i32) {
    %c0_i32 = arith.constant 0 : i32
    %c0_i32_0 = arith.constant 0 : i32
    %c0_i32_1 = arith.constant 0 : i32
    return %arg0, %c0_i32, %c0_i32_0 : i32, i32, i32
  }
  func.func @transform_1(%arg0: i32) -> (i32, i32) {
    %c0_i32 = arith.constant 0 : i32
    %c0_i32_0 = arith.constant 0 : i32
    %c0_i32_1 = arith.constant 0 : i32
    return %c0_i32, %c0_i32_0 : i32, i32
  }
  func.func @transform_2(%arg0: i32) -> (i32, i32) {
    %c0_i32 = arith.constant 0 : i32
    %c0_i32_0 = arith.constant 0 : i32
    %c0_i32_1 = arith.constant 0 : i32
    return %c0_i32, %c0_i32_0 : i32, i32
  }
  func.func @transform_3(%arg0: i32) -> (i32, i32, i32) {
    %c0_i32 = arith.constant 0 : i32
    %c0_i32_0 = arith.constant 0 : i32
    %c0_i32_1 = arith.constant 0 : i32
    return %arg0, %c0_i32, %c0_i32_0 : i32, i32, i32
  }
}

</mosaic_0001>

<llo_original>
// kernel: tpu_custom_call.1
$region0: #{tpu_custom_call.1}
  #allocation0 [shape = 'u32[]', space=smem, size = 0x4, offset = 0x4, fixed_abs, tag = 'smem constant byte address 0x4 - core index']
  #allocation1 [shape = 'u32[144,128]{1,0:T(1,128)}', space=vmem, size = 0x12000, scoped, tag = 'internal scratch']
  %s0 = inlined_call_operand.hbm [shape: f32[2,4,256], index: 0, kind: input, shape index: {}]
  %s1 = inlined_call_operand.vmem [shape: f32[3,4], index: 1, kind: input, shape index: {}]
  %s2 = inlined_call_operand.vmem [shape: f32[3,1], index: 2, kind: input, shape index: {}]
  %s3 = inlined_call_operand.vmem [shape: f32[2,3,256], index: 3, kind: output, shape index: {}]
  %s4 = sld [smem:[#allocation0]]
  $region49: #{tpu_custom_call.1} parent=0
    _
  %s6 = ssub.s32 1, %s4
  %s7 = scalar_select 0, %s6, %s4
  $region1: #{tpu_custom_call.1} parent=0
    #allocation2 [shape = 'u8[8192]{0}', space=vmem, size = 0x2000, scoped, tag = 'input window, operand 0']
    #allocation3 [shape = 's32[2]{0}', space=sflag, size = 0x8, scoped, tag = 'scoped memory for tpu_custom_call.1']
    %8 = vsyncpa [#allocation3], 0
    %s9 = scalar_lea.sflag [#allocation3], 1
    %10 = vsyncpa %s9, 0
    loop: start=0, step=1, limit=4
    $region2: #{tpu_custom_call.1} parent=1 // loop_pre_header
      _
    $region3: #{tpu_custom_call.1} parent=1 // loop_header
      %s12 = sphi 0, %s16
      %p13 = scmp.ge.s32.totalorder %s12, 4
      %s22 = sphi 0, %s24
      %s25 = sphi 0, %s22
      %s26 = sphi 0, %s25
      %s42 = sphi 0, %s26
      %s46 = sphi 0, %s46
      %s48 = sphi 0, %s46
      %s49 = sphi 0, %s48
      %s63 = sphi 0, %s49
      %s67 = sphi 0, %s67
      %s69 = sphi 0, %s67
      %s70 = sphi 0, %s69
      %s84 = sphi 0, %s70
      %s90 = sphi 0, %s92
      %s93 = sphi 0, %s90
      %s94 = sphi 0, %s93
      %s110 = sphi 0, %s94
    $region4: #{tpu_custom_call.1} parent=1 // loop_header_branch
      %15 = sbr.rel (%p13) target = $region8
    $region5: #{tpu_custom_call.1} parent=1 // loop_body
      %s17 = ssub.s32 %s12, 1
      %s18 = ssub.s32 %s12, 2
      %s19 = sadd.s32 %s12, 1
      %s20 = ssub.s32 %s12, %s19
      %p21 = scmp.eq.s32.totalorder %s20, 0
      %s23 = sadd.s32 %s22, 1
      %s24 = scalar_select %p21, %s22, %s23
      %p27 = pneg %p21
      %p28 = scmp.eq.s32.totalorder %s12, 1
      %p29 = por %p27, %p28
      %p30 = scmp.ne.s32.totalorder %s22, %s25
      %p31 = scmp.eq.s32.totalorder %s12, 0
      %p32 = por %p30, %p31
      %p33 = scmp.ne.s32.totalorder %s22, %s25
      %p34 = scmp.eq.s32.totalorder %s17, 1
      %p35 = por %p33, %p34
      %p36 = scmp.ne.s32.totalorder %s25, %s26
      %p37 = scmp.eq.s32.totalorder %s17, 0
      %p38 = por %p36, %p37
      %p39 = scmp.ne.s32.totalorder %s25, %s26
      %p40 = scmp.eq.s32.totalorder %s18, 1
      %p41 = por %p39, %p40
      %p43 = scmp.ne.s32.totalorder %s26, %s42
      %p44 = scmp.eq.s32.totalorder %s18, 0
      %p45 = por %p43, %p44
      %s47 = sadd.s32 %s46, 1
      %p50 = scmp.eq.s32.totalorder %s12, 1
      %p51 = scmp.ne.s32.totalorder %s46, %s48
      %p52 = scmp.eq.s32.totalorder %s12, 0
      %p53 = por %p51, %p52
      %p54 = scmp.ne.s32.totalorder %s46, %s48
      %p55 = scmp.eq.s32.totalorder %s17, 1
      %p56 = por %p54, %p55
      %p57 = scmp.ne.s32.totalorder %s48, %s49
      %p58 = scmp.eq.s32.totalorder %s17, 0
      %p59 = por %p57, %p58
      %p60 = scmp.ne.s32.totalorder %s48, %s49
      %p61 = scmp.eq.s32.totalorder %s18, 1
      %p62 = por %p60, %p61
      %p64 = scmp.ne.s32.totalorder %s49, %s63
      %p65 = scmp.eq.s32.totalorder %s18, 0
      %p66 = por %p64, %p65
      %s68 = sadd.s32 %s67, 1
      %p71 = scmp.eq.s32.totalorder %s12, 1
      %p72 = scmp.ne.s32.totalorder %s67, %s69
      %p73 = scmp.eq.s32.totalorder %s12, 0
      %p74 = por %p72, %p73
      %p75 = scmp.ne.s32.totalorder %s67, %s69
      %p76 = scmp.eq.s32.totalorder %s17, 1
      %p77 = por %p75, %p76
      %p78 = scmp.ne.s32.totalorder %s69, %s70
      %p79 = scmp.eq.s32.totalorder %s17, 0
      %p80 = por %p78, %p79
      %p81 = scmp.ne.s32.totalorder %s69, %s70
      %p82 = scmp.eq.s32.totalorder %s18, 1
      %p83 = por %p81, %p82
      %p85 = scmp.ne.s32.totalorder %s70, %s84
      %p86 = scmp.eq.s32.totalorder %s18, 0
      %p87 = por %p85, %p86
      %s88 = ssub.s32 %s12, %s19
      %p89 = scmp.eq.s32.totalorder %s88, 0
      %s91 = sadd.s32 %s90, 1
      %s92 = scalar_select %p89, %s90, %s91
      %p95 = pneg %p89
      %p96 = scmp.eq.s32.totalorder %s12, 1
      %p97 = por %p95, %p96
      %p98 = scmp.ne.s32.totalorder %s90, %s93
      %p99 = scmp.eq.s32.totalorder %s12, 0
      %p100 = por %p98, %p99
      %p101 = scmp.ne.s32.totalorder %s90, %s93
      %p102 = scmp.eq.s32.totalorder %s17, 1
      %p103 = por %p101, %p102
      %p104 = scmp.ne.s32.totalorder %s93, %s94
      %p105 = scmp.eq.s32.totalorder %s17, 0
      %p106 = por %p104, %p105
      %p107 = scmp.ne.s32.totalorder %s93, %s94
      %p108 = scmp.eq.s32.totalorder %s18, 1
      %p109 = por %p107, %p108
      %p111 = scmp.ne.s32.totalorder %s94, %s110
      %p112 = scmp.eq.s32.totalorder %s18, 0
      %p113 = por %p111, %p112
      %p114 = scmp.le.s32.totalorder 1, %s12
      %p115 = scmp.lt.s32.totalorder %s12, 3
      %p116 = pnand %p114, %p115
      %p117 = pneg %p116
      // Predicated region
      $region9: #{tpu_custom_call.1} parent=5 // pred_check
        _
      $region10: #{tpu_custom_call.1} parent=5 // pred_check_branch
        %119 = sbr.rel (%p116) target = $region12
      $region11: #{tpu_custom_call.1} parent=5 // pred_region
        %s120 = ssub.s32 %s12, 1
        // Predicated region
        $region13: #{tpu_custom_call.1} parent=11 // pred_check
          %p121 = pneg %p59
        $region14: #{tpu_custom_call.1} parent=11 // pred_check_branch
          %123 = sbr.rel (%p121) target = $region16
        $region15: #{tpu_custom_call.1} parent=11 // pred_region
          _
        $region16: #{tpu_custom_call.1} parent=11 // pred_fallthru
          _
        // Predicated region
        $region17: #{tpu_custom_call.1} parent=11 // pred_check
          %p124 = pneg %p80
        $region18: #{tpu_custom_call.1} parent=11 // pred_check_branch
          %126 = sbr.rel (%p124) target = $region20
        $region19: #{tpu_custom_call.1} parent=11 // pred_region
          _
        $region20: #{tpu_custom_call.1} parent=11 // pred_fallthru
          _
      $region12: #{tpu_custom_call.1} parent=5 // pred_fallthru
        _
      %p127 = scmp.lt.s32.totalorder %s12, 2
      // Predicated region
      $region21: #{tpu_custom_call.1} parent=5 // pred_check
        %p128 = pneg %p127
      $region22: #{tpu_custom_call.1} parent=5 // pred_check_branch
        %130 = sbr.rel (%p128) target = $region24
      $region23: #{tpu_custom_call.1} parent=5 // pred_region
        // Predicated region
        $region25: #{tpu_custom_call.1} parent=23 // pred_check
          %p131 = pneg %p32
        $region26: #{tpu_custom_call.1} parent=23 // pred_check_branch
          %133 = sbr.rel (%p131) target = $region28
        $region27: #{tpu_custom_call.1} parent=23 // pred_region
          %s134 = sand.u32 %s22, 1
          %s135 = scalar_lea.sflag [#allocation3], %s134
          %s136 = sand.u32 %s22, 1
          %s137 = smul.addr %s136, 8
          %s138 = scalar_lea.vmem [#allocation2], %s137
          %s140 = ssub.s32 128, 128
          %141 = vsyncadd %s135, %s140
          %s142 = smul.addr %s12, 2
          %s143 = smul.addr %s142, 64
          %s144 = scalar_lea.hbm %s0, %s143
          %s146 = sshll.u32 %s138, 4
          %s147 = int_to_ptr.vmem [resolvable:$true] %s146
          %149 = dma.hbm_to_vmem [thread:$0]  %s144, 128, %s147, %s135
        $region28: #{tpu_custom_call.1} parent=23 // pred_fallthru
          _
      $region24: #{tpu_custom_call.1} parent=5 // pred_fallthru
        _
      %p150 = scmp.le.s32.totalorder 1, %s12
      %p151 = scmp.lt.s32.totalorder %s12, 3
      %p152 = pnand %p150, %p151
      %p153 = pneg %p152
      // Predicated region
      $region29: #{tpu_custom_call.1} parent=5 // pred_check
        _
      $region30: #{tpu_custom_call.1} parent=5 // pred_check_branch
        %155 = sbr.rel (%p152) target = $region32
      $region31: #{tpu_custom_call.1} parent=5 // pred_region
        %s156 = ssub.s32 %s12, 1
        %s157 = sand.u32 %s25, 1
        %s158 = scalar_lea.sflag [#allocation3], %s157
        %s159 = sand.u32 %s25, 1
        %s160 = smul.addr %s159, 8
        %s161 = scalar_lea.vmem [#allocation2], %s160
        // Predicated region
        $region33: #{tpu_custom_call.1} parent=31 // pred_check
          %p162 = pneg %p38
        $region34: #{tpu_custom_call.1} parent=31 // pred_check_branch
          %164 = sbr.rel (%p162) target = $region36
        $region35: #{tpu_custom_call.1} parent=31 // pred_region
          %165 = dma.done %s158, 128
        $region36: #{tpu_custom_call.1} parent=31 // pred_fallthru
          _
        %s166 = sand.u32 %s25, 1
        %s167 = scalar_lea.sflag [#allocation3], %s166
        %s168 = sand.u32 %s25, 1
        %s169 = smul.addr %s168, 8
        %s170 = scalar_lea.vmem [#allocation2], %s169
        %p171 = pneg %p38
        %p172 = pneg %p35
        %p173 = pneg %p59
        %p174 = pneg %p56
        %p175 = pneg %p80
        %p176 = pneg %p77
        %p177 = pneg %p106
        %p178 = pneg %p103
        %p179 = scmp.lt.s32.totalorder %s17, 1
        %s180 = scalar_select %p179, %s17, 1
        %s181 = smul.addr %s180, 2
        %s182 = smul.addr %s181, 4
        %s183 = scalar_lea.vmem %s3, %s182
        %p184 = scmp.lt.s32.totalorder %s17, 1
        %s185 = scalar_select %p184, %s17, 1
        %s186 = smul.addr %s185, 2
        %s187 = smul.addr %s186, 4
        %s188 = scalar_lea.vmem %s3, %s187
        %v189 = vld [vmem:[%s161] sm:$0xff]
        %v190 = vld [vmem:[%s1] sm:$0x7]
        %v191 = vld [vmem:[%s2] sm:$0x7]
        %v192 = vlaneseq
        %v193 = vshrl.u32 %v192, 7
        %v194 = vsub.s32 0, %v193
        %v195 = vrot.slane %v190, %v194
        %197 = vbcast.lane.b32.xlu0 %v195, 256
        %v198 = vpop.permute.xlu0 %197
        %v199 = vlaneseq
        %v200 = vshrl.u32 %v199, 7
        %v201 = vsub.s32 1, %v200
        %v202 = vrot.slane %v190, %v201
        %204 = vbcast.lane.b32.xlu0 %v202, 256
        %v205 = vpop.permute.xlu0 %204
        %v206 = vlaneseq
        %v207 = vshrl.u32 %v206, 7
        %v208 = vsub.s32 2, %v207
        %v209 = vrot.slane %v190, %v208
        %211 = vbcast.lane.b32.xlu0 %v209, 256
        %v212 = vpop.permute.xlu0 %211
        %v214 = vcombine.high %v189, %v189
        %v216 = vmul.f32 %v198, %v189
        %v217 = vmul.f32 %v198, %v214
        %v218 = vmul.f32 %v205, %v189
        %v219 = vmul.f32 %v205, %v214
        %v220 = vmul.f32 %v212, %v189
        %v221 = vmul.f32 %v212, %v214
        %vm222 = vcmask 1043456
        %v223 = vsel %vm222, %v216, 0.0
        %v224 = vrot.slane %v223, 4
        %v225 = vadd.f32 %v223, %v224
        %v226 = vrot.slane %v225, 2
        %v227 = vadd.f32 %v225, %v226
        %v228 = vrot.slane %v227, 1
        %v229 = vadd.f32 %v227, %v228
        %v230 = vsel %vm222, %v217, 0.0
        %v231 = vrot.slane %v230, 4
        %v232 = vadd.f32 %v230, %v231
        %v233 = vrot.slane %v232, 2
        %v234 = vadd.f32 %v232, %v233
        %v235 = vrot.slane %v234, 1
        %v236 = vadd.f32 %v234, %v235
        %v237 = vsel %vm222, %v218, 0.0
        %v238 = vrot.slane %v237, 4
        %v239 = vadd.f32 %v237, %v238
        %v240 = vrot.slane %v239, 2
        %v241 = vadd.f32 %v239, %v240
        %v242 = vrot.slane %v241, 1
        %v243 = vadd.f32 %v241, %v242
        %v244 = vsel %vm222, %v219, 0.0
        %v245 = vrot.slane %v244, 4
        %v246 = vadd.f32 %v244, %v245
        %v247 = vrot.slane %v246, 2
        %v248 = vadd.f32 %v246, %v247
        %v249 = vrot.slane %v248, 1
        %v250 = vadd.f32 %v248, %v249
        %v251 = vsel %vm222, %v220, 0.0
        %v252 = vrot.slane %v251, 4
        %v253 = vadd.f32 %v251, %v252
        %v254 = vrot.slane %v253, 2
        %v255 = vadd.f32 %v253, %v254
        %v256 = vrot.slane %v255, 1
        %v257 = vadd.f32 %v255, %v256
        %v258 = vsel %vm222, %v221, 0.0
        %v259 = vrot.slane %v258, 4
        %v260 = vadd.f32 %v258, %v259
        %v261 = vrot.slane %v260, 2
        %v262 = vadd.f32 %v260, %v261
        %v263 = vrot.slane %v262, 1
        %v264 = vadd.f32 %v262, %v263
        %266 = vset.pattern.permute.xlu0 0
        %267 = vperm.xlu0 %266, %v191
        %v268 = vpop.permute.xlu0 %267
        %v269 = vrot.slane %v268, 1
        %v270 = vrot.slane %v268, 2
        %v274 = vadd.f32 %v229, %v268
        %v275 = vadd.f32 %v236, %v268
        %v276 = vadd.f32 %v243, %v269
        %v277 = vadd.f32 %v250, %v269
        %v278 = vadd.f32 %v257, %v270
        %v279 = vadd.f32 %v264, %v270
        %v286 = vrot.slane %v276, 7
        %vm287 = vcmask 1041409
        %v288 = vsel %vm287, %v286, %v274
        %v289 = vrot.slane %v278, 6
        %vm290 = vcmask 1042434
        %v291 = vsel %vm290, %v289, %v288
        %v292 = vrot.slane %v277, 7
        %v293 = vsel %vm287, %v292, %v275
        %v294 = vrot.slane %v279, 6
        %v295 = vsel %vm290, %v294, %v293
        %vm298 = vcmask 1042432
        %v299 = vsel %vm298, %v291, 0.0
        %v300 = vsel %vm298, %v295, 0.0
        %v301 = vadd.f32 %v299, %v300
        %302 = vadd.xlane.f32.xlu0 %v301
        %v303 = vpop.xlane.xlu0 %302
        %v304 = vrcp.pop 256.0
        %v305 = vmul.f32 %v303, %v304
        %v307 = vrot.slane %v305, 1
        %v308 = vrot.slane %v305, 2
        %v312 = vsub.f32 %v274, %v305
        %v313 = vsub.f32 %v275, %v305
        %v314 = vsub.f32 %v276, %v307
        %v315 = vsub.f32 %v277, %v307
        %v316 = vsub.f32 %v278, %v308
        %v317 = vsub.f32 %v279, %v308
        %v318 = vmul.f32 %v312, %v312
        %v319 = vmul.f32 %v313, %v313
        %v320 = vmul.f32 %v314, %v314
        %v321 = vmul.f32 %v315, %v315
        %v322 = vmul.f32 %v316, %v316
        %v323 = vmul.f32 %v317, %v317
        %v330 = vrot.slane %v320, 7
        %v331 = vsel %vm287, %v330, %v318
        %v332 = vrot.slane %v322, 6
        %v333 = vsel %vm290, %v332, %v331
        %v334 = vrot.slane %v321, 7
        %v335 = vsel %vm287, %v334, %v319
        %v336 = vrot.slane %v323, 6
        %v337 = vsel %vm290, %v336, %v335
        %v340 = vsel %vm298, %v333, 0.0
        %v341 = vsel %vm298, %v337, 0.0
        %v342 = vadd.f32 %v340, %v341
        %343 = vadd.xlane.f32.xlu0 %v342
        %v344 = vpop.xlane.xlu0 %343
        %v345 = vmul.f32 %v344, %v304
        %v346 = vadd.f32 %v345, 1e-05
        %v347 = vrsqrt.pop %v346
        %v349 = vrot.slane %v347, 1
        %v350 = vrot.slane %v347, 2
        %v354 = vmul.f32 %v312, %v347
        %v355 = vmul.f32 %v313, %v347
        %v356 = vmul.f32 %v314, %v349
        %v357 = vmul.f32 %v315, %v349
        %v358 = vmul.f32 %v316, %v350
        %v359 = vmul.f32 %v317, %v350
        %v360 = vtanh.pop %v354
        %v361 = vtanh.pop %v355
        %v362 = vtanh.pop %v356
        %v363 = vtanh.pop %v357
        %v364 = vtanh.pop %v358
        %v365 = vtanh.pop %v359
        %v372 = vcombine.low %v360, %v361
        %v373 = vcombine.low %v362, %v363
        %v374 = vcombine.low %v364, %v365
        %v375 = vrot.slane %v373, 7
        %v376 = vsel %vm287, %v375, %v372
        %vm377 = vcmask 1045509
        %v378 = vsel %vm377, %v375, %v376
        %v379 = vrot.slane %v374, 6
        %v380 = vsel %vm290, %v379, %v378
        %vm381 = vcmask 1046534
        %v382 = vsel %vm381, %v379, %v380
        %384 = vst [vmem:[%s188] sm:$0x77] %v382
        %p385 = scmp.lt.s32.totalorder %s17, 1
        %s386 = scalar_select %p385, %s17, 1
        %s387 = smul.addr %s386, 2
        %s388 = smul.addr %s387, 4
        %s389 = scalar_lea.vmem %s3, %s388
        // Predicated region
        $region37: #{tpu_custom_call.1} parent=31 // pred_check
          %p390 = pneg %p103
        $region38: #{tpu_custom_call.1} parent=31 // pred_check_branch
          %392 = sbr.rel (%p390) target = $region40
        $region39: #{tpu_custom_call.1} parent=31 // pred_region
          _
        $region40: #{tpu_custom_call.1} parent=31 // pred_fallthru
          _
      $region32: #{tpu_custom_call.1} parent=5 // pred_fallthru
        _
      %p393 = scmp.le.s32.totalorder 2, %s12
      // Predicated region
      $region41: #{tpu_custom_call.1} parent=5 // pred_check
        %p394 = pneg %p393
      $region42: #{tpu_custom_call.1} parent=5 // pred_check_branch
        %396 = sbr.rel (%p394) target = $region44
      $region43: #{tpu_custom_call.1} parent=5 // pred_region
        %s397 = ssub.s32 %s12, 2
        // Predicated region
        $region45: #{tpu_custom_call.1} parent=43 // pred_check
          %p398 = pneg %p109
        $region46: #{tpu_custom_call.1} parent=43 // pred_check_branch
          %400 = sbr.rel (%p398) target = $region48
        $region47: #{tpu_custom_call.1} parent=43 // pred_region
          %p401 = scmp.lt.s32.totalorder %s18, 1
          %s402 = scalar_select %p401, %s18, 1
          %s403 = smul.addr %s402, 2
          %s404 = smul.addr %s403, 4
          %s405 = scalar_lea.vmem %s3, %s404
        $region48: #{tpu_custom_call.1} parent=43 // pred_fallthru
          _
      $region44: #{tpu_custom_call.1} parent=5 // pred_fallthru
        _
    $region6: #{tpu_custom_call.1} parent=1 // loop_footer
      %s16 = sadd.s32 1, %s12
    $region7: #{tpu_custom_call.1} parent=1 // loop_footer_branch
      %11 = sbr.rel target = $region3
    $region8: #{tpu_custom_call.1} parent=1 // loop_exit
      _
    %406 = vsyncpa [#allocation3], 1
    %s407 = scalar_lea.sflag [#allocation3], 1
    %408 = vsyncpa %s407, 1

</llo_original>
